<compile_context>
chip_gen: v5e
topology: v5e:2x2
jax: 0.10.0
libtpu: 0.0.40
codegen_flags: <defaults>
</compile_context>

<pallas_src>
import functools

import jax
import jax.numpy as jnp
from jax.experimental import pallas as pl
from jax.experimental.pallas import tpu as pltpu

_LANE = 128
_ALIGN_1D = 8 * _LANE          # 1-D blocks: whole (8,128) tiles
_BUDGET_CAP = 48 << 20         # max double-buffered VMEM for the 3 arrays
_VMEM_HEADROOM = 16 << 20      # slack on top of the budget for vmem_limit


def _focal_kernel(x_ref, t_ref, o_ref):
    x = x_ref[...].astype(jnp.float32)
    t = t_ref[...].astype(jnp.float32)
    max_val = jnp.maximum(-x, 0.0)  # (-input).clamp(min=0)
    # log(exp(-max_val) + exp(-x - max_val)) == log1p(exp(-|x|))
    loss = x - x * t + max_val + jnp.log1p(jnp.exp(-jnp.abs(x)))
    o_ref[...] = loss.astype(o_ref.dtype)


def _cdiv(a, b):
    return -(-a // b)


def _round_up(a, b):
    return _cdiv(a, b) * b


@functools.lru_cache(maxsize=1)
def _vmem_capacity_bytes():
    try:
        return int(pltpu.get_tpu_info().vmem_capacity_bytes)
    except Exception:
        return 64 << 20  # conservative default (v7x per-TensorCore VMEM)


def _tiling_params(bytes_per_elem):
    """Byte-budgeted tiling sized from the actual VMEM capacity."""
    capacity = _vmem_capacity_bytes()
    # Total double-buffered VMEM the 3 streamed arrays may occupy:
    #  v5e/v6e (128 MiB): 48 MiB -> ~8 MiB/array per step (needs explicit
    #  vmem_limit; v5e scoped default is only 16 MiB).
    #  v7x (64 MiB/TC):   32 MiB -> ~5 MiB/array per step.
    budget = min(capacity // 2, _BUDGET_CAP)
    per_step_bytes = budget // 2  # /2 for double buffering
    max_block_elems = max(
        _ALIGN_1D, (per_step_bytes // bytes_per_elem) // _ALIGN_1D * _ALIGN_1D
    )
    # Heuristic: <=96 MiB VMEM per core => 2-TensorCore part (v7x);
    # v5e/v6e expose 128 MiB and have a single TC.
    two_tc = capacity <= (96 << 20)
    vmem_limit = budget + _VMEM_HEADROOM
    return max_block_elems, two_tc, vmem_limit


def _sublane_quantum(*dtypes):
    """Smallest row multiple that keeps every dtype's native tiling happy."""
    min_bytes = min(jnp.dtype(d).itemsize for d in dtypes)
    return 8 * max(1, 4 // max(min_bytes, 1))  # 8 f32, 16 bf16/f16, 32 int8


def _choose_blocks(n_units, max_block_units, quantum, prefer_even):
    """Pick a block size (multiple of `quantum`) and the grid length.

    On 2-TC parts we make the number of blocks even so both TensorCores get
    the same amount of DMA work; on 1-TC parts small inputs stay one block.
    """
    nblocks = max(1, _cdiv(n_units, max_block_units))
    if prefer_even and n_units >= 2 * quantum and nblocks % 2 == 1:
        nblocks += 1
    block = _round_up(_cdiv(n_units, nblocks), quantum)
    if block >= n_units:
        block = n_units  # single full-extent block (always a legal block shape)
    return block, _cdiv(n_units, block)


def _run(x, t, out_dtype, block_shape, grid, index_map, vmem_limit, cost):
    return pl.pallas_call(
        _focal_kernel,
        out_shape=jax.ShapeDtypeStruct(x.shape, out_dtype),
        grid_spec=pltpu.PrefetchScalarGridSpec(
            num_scalar_prefetch=0,
            grid=grid,
            in_specs=[
                pl.BlockSpec(block_shape, index_map),
                pl.BlockSpec(block_shape, index_map),
            ],
            out_specs=pl.BlockSpec(block_shape, index_map),
        ),
        compiler_params=pltpu.CompilerParams(
            dimension_semantics=("parallel",),
            vmem_limit_bytes=vmem_limit,
        ),
        cost_estimate=cost,
    )(x, t)


def focal_loss(inp, target, gamma=2.0):
    """Elementwise focal-loss base term; matches the PyTorch module forward.

    gamma is accepted for API parity with the nn.Module but (like the
    reference forward) does not affect the result.
    """
    if inp.shape != target.shape:
        raise ValueError(
            "Target size ({}) must be the same as input size ({})".format(
                target.shape, inp.shape
            )
        )
    orig_shape = inp.shape
    out_dtype = inp.dtype

    x = inp.reshape(-1)      # free (contiguous) reshape, no copy
    t = target.reshape(-1)
    n = x.shape[0]
    if n == 0:
        return jnp.zeros(orig_shape, out_dtype)

    bytes_per_elem = (
        jnp.dtype(x.dtype).itemsize
        + jnp.dtype(t.dtype).itemsize
        + jnp.dtype(out_dtype).itemsize
    )
    max_block_elems, two_tc, vmem_limit = _tiling_params(bytes_per_elem)
    cost = pl.CostEstimate(
        flops=7 * n, transcendentals=2 * n, bytes_accessed=n * bytes_per_elem
    )

    if n % _LANE == 0:
        # Lane-aligned: free reshape to a lane-dense 2-D slab (best layout).
        rows = n // _LANE
        quantum = _sublane_quantum(x.dtype, t.dtype, out_dtype)
        max_block_rows = max(
            quantum, (max_block_elems // _LANE) // quantum * quantum
        )
        block_rows, nblk = _choose_blocks(rows, max_block_rows, quantum, two_tc)
        out = _run(
            x.reshape(rows, _LANE), t.reshape(rows, _LANE), out_dtype,
            (block_rows, _LANE), (nblk,), lambda i: (i, 0), vmem_limit, cost,
        )
        return out.reshape(orig_shape)

    # Flat size is not a multiple of the 128-lane width: run directly on the
    # 1-D array (cdiv grid, Pallas masks the partial tail block) so neither
    # input is padded nor the output sliced -> no extra HBM copies.
    # Note: the fallback below only engages eagerly; under jit the 1-D path is
    # used unconditionally.
    try:
        block_elems, nblk = _choose_blocks(n, max_block_elems, _ALIGN_1D, two_tc)
        out = _run(
            x, t, out_dtype, (block_elems,), (nblk,), lambda i: (i,),
            vmem_limit, cost,
        )
        return out.reshape(orig_shape)
    except Exception:
        pass  # rank-1 lowering unavailable -> padded 2-D fallback below

    pad = (-n) % _LANE
    xp = jnp.pad(x, (0, pad))
    tp = jnp.pad(t, (0, pad))
    rows = (n + pad) // _LANE
    quantum = _sublane_quantum(x.dtype, t.dtype, out_dtype)
    max_block_rows = max(quantum, (max_block_elems // _LANE) // quantum * quantum)
    block_rows, nblk = _choose_blocks(rows, max_block_rows, quantum, two_tc)
    out = _run(
        xp.reshape(rows, _LANE), tp.reshape(rows, _LANE), out_dtype,
        (block_rows, _LANE), (nblk,), lambda i: (i, 0), vmem_limit, cost,
    )
    return out.reshape(-1)[:n].reshape(orig_shape)


def _focal_loss_ref(inp, target):
    x = inp.astype(jnp.float32)
    t = target.astype(jnp.float32)
    max_val = jnp.maximum(-x, 0.0)
    return (
        x - x * t + max_val + jnp.log(jnp.exp(-max_val) + jnp.exp(-x - max_val))
    ).astype(inp.dtype)


if __name__ == "__main__":
    key = jax.random.PRNGKey(0)
    k1, k2 = jax.random.split(key)
    # Small NCHW shapes: batch=2, channels=4, spatial=16x16
    x = jax.random.normal(k1, (2, 4, 16, 16), dtype=jnp.float32) * 3.0
    tgt = jax.random.uniform(k2, (2, 4, 16, 16), dtype=jnp.float32)

    gamma = 2.0  # unused in forward, kept for module parity
    out = jax.block_until_ready(focal_loss(x, tgt, gamma))
    ref = _focal_loss_ref(x, tgt)
    assert out.shape == x.shape and out.dtype == x.dtype
    assert jnp.allclose(out, ref, atol=1e-5, rtol=1e-5)

    # Non-multiple-of-128 flat size: exercises the copy-free 1-D path
    # (or its padded fallback if rank-1 lowering is unavailable).
    x_odd = jax.random.normal(k1, (3, 5, 7, 11), dtype=jnp.float32)
    t_odd = jax.random.uniform(k2, (3, 5, 7, 11), dtype=jnp.float32)
    out_odd = jax.block_until_ready(focal_loss(x_odd, t_odd, gamma))
    assert out_odd.shape == x_odd.shape
    assert jnp.allclose(out_odd, _focal_loss_ref(x_odd, t_odd), atol=1e-5, rtol=1e-5)

    print("KERNEL_OK")
</pallas_src>

<mosaic_0001>
module attributes {stable_mosaic.version = 11 : i64} {
  func.func @_focal_kernel(%arg0: i32, %arg1: memref<8x128xf32, #tpu.memory_space<vmem>>, %arg2: memref<8x128xf32, #tpu.memory_space<vmem>>, %arg3: memref<8x128xf32, #tpu.memory_space<vmem>>) attributes {dimension_semantics = [#tpu.dimension_semantics<parallel>], iteration_bounds = array<i64: 2>, scalar_prefetch = 0 : i64, scratch_operands = 0 : i64, tpu.core_type = #tpu.core_type<tc>, window_params = [{transform_indices = @transform_0, window_bounds = array<i64: 8, 128>}, {transform_indices = @transform_1, window_bounds = array<i64: 8, 128>}, {transform_indices = @transform_2, window_bounds = array<i64: 8, 128>}]} {
    %c0 = arith.constant 0 : index
    %c0_0 = arith.constant 0 : index
    %0 = vector.load %arg1[%c0, %c0_0] : memref<8x128xf32, #tpu.memory_space<vmem>>, vector<8x128xf32>
    %c0_1 = arith.constant 0 : index
    %c0_2 = arith.constant 0 : index
    %1 = vector.load %arg2[%c0_1, %c0_2] : memref<8x128xf32, #tpu.memory_space<vmem>>, vector<8x128xf32>
    %cst = arith.constant 0.000000e+00 : f32
    %2 = vector.broadcast %cst : f32 to vector<8x128xf32>
    %3 = arith.subf %2, %0 : vector<8x128xf32>
    %cst_3 = arith.constant 0.000000e+00 : f32
    %4 = vector.broadcast %cst_3 : f32 to vector<8x128xf32>
    %5 = arith.maximumf %3, %4 : vector<8x128xf32>
    %6 = arith.mulf %0, %1 : vector<8x128xf32>
    %7 = arith.subf %0, %6 : vector<8x128xf32>
    %8 = arith.addf %7, %5 : vector<8x128xf32>
    %9 = math.absf %0 : vector<8x128xf32>
    %cst_4 = arith.constant 0.000000e+00 : f32
    %10 = vector.broadcast %cst_4 : f32 to vector<8x128xf32>
    %11 = arith.subf %10, %9 : vector<8x128xf32>
    %12 = math.exp %11 : vector<8x128xf32>
    %13 = math.log1p %12 : vector<8x128xf32>
    %14 = arith.addf %8, %13 : vector<8x128xf32>
    %c0_5 = arith.constant 0 : index
    %c0_6 = arith.constant 0 : index
    %15 = vector.load %arg3[%c0_5, %c0_6] : memref<8x128xf32, #tpu.memory_space<vmem>>, vector<8x128xf32>
    tpu.vector_store %arg3[%c0_5, %c0_6], %14 {strides = array<i32>} : memref<8x128xf32, #tpu.memory_space<vmem>>, vector<8x128xf32>,
    return
  }
  func.func @transform_0(%arg0: i32) -> (i32, i32) {
    %c0_i32 = arith.constant 0 : i32
    %c0_i32_0 = arith.constant 0 : i32
    return %arg0, %c0_i32 : i32, i32
  }
  func.func @transform_1(%arg0: i32) -> (i32, i32) {
    %c0_i32 = arith.constant 0 : i32
    %c0_i32_0 = arith.constant 0 : i32
    return %arg0, %c0_i32 : i32, i32
  }
  func.func @transform_2(%arg0: i32) -> (i32, i32) {
    %c0_i32 = arith.constant 0 : i32
    %c0_i32_0 = arith.constant 0 : i32
    return %arg0, %c0_i32 : i32, i32
  }
}

</mosaic_0001>

<llo_original>
// kernel: tpu_custom_call.1
$region0: #{tpu_custom_call.1}
  #allocation0 [shape = 'u32[]', space=smem, size = 0x4, offset = 0x4, fixed_abs, tag = 'smem constant byte address 0x4 - core index']
  #allocation1 [shape = 'u32[72,128]{1,0:T(1,128)}', space=vmem, size = 0x9000, scoped, tag = 'internal scratch']
  %s0 = inlined_call_operand.hbm [shape: f32[16,128], index: 0, kind: input, shape index: {}]
  %s1 = inlined_call_operand.hbm [shape: f32[16,128], index: 1, kind: input, shape index: {}]
  %s2 = inlined_call_operand.hbm [shape: f32[16,128], index: 2, kind: output, shape index: {}]
  %s3 = sld [smem:[#allocation0]]
  $region49: #{tpu_custom_call.1} parent=0
    _
  %s5 = ssub.s32 1, %s3
  %s6 = scalar_select 0, %s5, %s3
  $region1: #{tpu_custom_call.1} parent=0
    #allocation2 [shape = 'u8[8192]{0}', space=vmem, size = 0x2000, scoped, tag = 'input window, operand 0']
    #allocation3 [shape = 's32[2]{0}', space=sflag, size = 0x8, scoped, tag = 'scoped memory for tpu_custom_call.1']
    #allocation4 [shape = 's32[2]{0}', space=sflag, size = 0x8, scoped, tag = 'scoped memory for tpu_custom_call.1']
    #allocation5 [shape = 'u8[8192]{0}', space=vmem, size = 0x2000, scoped, tag = 'input window, operand 1']
    #allocation6 [shape = 's32[2]{0}', space=sflag, size = 0x8, scoped, tag = 'scoped memory for tpu_custom_call.1']
    #allocation7 [shape = 'u8[8192]{0}', space=vmem, size = 0x2000, scoped, tag = 'output window, operand 0']
    %7 = vsyncpa [#allocation3], 0
    %s8 = scalar_lea.sflag [#allocation3], 1
    %9 = vsyncpa %s8, 0
    %10 = vsyncpa [#allocation6], 0
    %s11 = scalar_lea.sflag [#allocation6], 1
    %12 = vsyncpa %s11, 0
    %13 = vsyncpa [#allocation4], 0
    %s14 = scalar_lea.sflag [#allocation4], 1
    %15 = vsyncpa %s14, 0
    loop: start=0, step=1, limit=4
    $region2: #{tpu_custom_call.1} parent=1 // loop_pre_header
      _
    $region3: #{tpu_custom_call.1} parent=1 // loop_header
      %s17 = sphi 0, %s21
      %p18 = scmp.ge.s32.totalorder %s17, 4
      %s27 = sphi 0, %s29
      %s30 = sphi 0, %s27
      %s31 = sphi 0, %s30
      %s47 = sphi 0, %s31
      %s53 = sphi 0, %s55
      %s56 = sphi 0, %s53
      %s57 = sphi 0, %s56
      %s73 = sphi 0, %s57
      %s79 = sphi 0, %s81
      %s82 = sphi 0, %s79
      %s83 = sphi 0, %s82
      %s99 = sphi 0, %s83
    $region4: #{tpu_custom_call.1} parent=1 // loop_header_branch
      %20 = sbr.rel (%p18) target = $region8
    $region5: #{tpu_custom_call.1} parent=1 // loop_body
      %s22 = ssub.s32 %s17, 1
      %s23 = ssub.s32 %s17, 2
      %s24 = sadd.s32 %s17, 1
      %s25 = ssub.s32 %s17, %s24
      %p26 = scmp.eq.s32.totalorder %s25, 0
      %s28 = sadd.s32 %s27, 1
      %s29 = scalar_select %p26, %s27, %s28
      %p32 = pneg %p26
      %p33 = scmp.eq.s32.totalorder %s17, 1
      %p34 = por %p32, %p33
      %p35 = scmp.ne.s32.totalorder %s27, %s30
      %p36 = scmp.eq.s32.totalorder %s17, 0
      %p37 = por %p35, %p36
      %p38 = scmp.ne.s32.totalorder %s27, %s30
      %p39 = scmp.eq.s32.totalorder %s22, 1
      %p40 = por %p38, %p39
      %p41 = scmp.ne.s32.totalorder %s30, %s31
      %p42 = scmp.eq.s32.totalorder %s22, 0
      %p43 = por %p41, %p42
      %p44 = scmp.ne.s32.totalorder %s30, %s31
      %p45 = scmp.eq.s32.totalorder %s23, 1
      %p46 = por %p44, %p45
      %p48 = scmp.ne.s32.totalorder %s31, %s47
      %p49 = scmp.eq.s32.totalorder %s23, 0
      %p50 = por %p48, %p49
      %s51 = ssub.s32 %s17, %s24
      %p52 = scmp.eq.s32.totalorder %s51, 0
      %s54 = sadd.s32 %s53, 1
      %s55 = scalar_select %p52, %s53, %s54
      %p58 = pneg %p52
      %p59 = scmp.eq.s32.totalorder %s17, 1
      %p60 = por %p58, %p59
      %p61 = scmp.ne.s32.totalorder %s53, %s56
      %p62 = scmp.eq.s32.totalorder %s17, 0
      %p63 = por %p61, %p62
      %p64 = scmp.ne.s32.totalorder %s53, %s56
      %p65 = scmp.eq.s32.totalorder %s22, 1
      %p66 = por %p64, %p65
      %p67 = scmp.ne.s32.totalorder %s56, %s57
      %p68 = scmp.eq.s32.totalorder %s22, 0
      %p69 = por %p67, %p68
      %p70 = scmp.ne.s32.totalorder %s56, %s57
      %p71 = scmp.eq.s32.totalorder %s23, 1
      %p72 = por %p70, %p71
      %p74 = scmp.ne.s32.totalorder %s57, %s73
      %p75 = scmp.eq.s32.totalorder %s23, 0
      %p76 = por %p74, %p75
      %s77 = ssub.s32 %s17, %s24
      %p78 = scmp.eq.s32.totalorder %s77, 0
      %s80 = sadd.s32 %s79, 1
      %s81 = scalar_select %p78, %s79, %s80
      %p84 = pneg %p78
      %p85 = scmp.eq.s32.totalorder %s17, 1
      %p86 = por %p84, %p85
      %p87 = scmp.ne.s32.totalorder %s79, %s82
      %p88 = scmp.eq.s32.totalorder %s17, 0
      %p89 = por %p87, %p88
      %p90 = scmp.ne.s32.totalorder %s79, %s82
      %p91 = scmp.eq.s32.totalorder %s22, 1
      %p92 = por %p90, %p91
      %p93 = scmp.ne.s32.totalorder %s82, %s83
      %p94 = scmp.eq.s32.totalorder %s22, 0
      %p95 = por %p93, %p94
      %p96 = scmp.ne.s32.totalorder %s82, %s83
      %p97 = scmp.eq.s32.totalorder %s23, 1
      %p98 = por %p96, %p97
      %p100 = scmp.ne.s32.totalorder %s83, %s99
      %p101 = scmp.eq.s32.totalorder %s23, 0
      %p102 = por %p100, %p101
      %p103 = scmp.le.s32.totalorder 1, %s17
      %p104 = scmp.lt.s32.totalorder %s17, 3
      %p105 = pnand %p103, %p104
      %p106 = pneg %p105
      // Predicated region
      $region9: #{tpu_custom_call.1} parent=5 // pred_check
        _
      $region10: #{tpu_custom_call.1} parent=5 // pred_check_branch
        %108 = sbr.rel (%p105) target = $region12
      $region11: #{tpu_custom_call.1} parent=5 // pred_region
        %s109 = ssub.s32 %s17, 1
      $region12: #{tpu_custom_call.1} parent=5 // pred_fallthru
        _
      %p110 = scmp.lt.s32.totalorder %s17, 2
      // Predicated region
      $region13: #{tpu_custom_call.1} parent=5 // pred_check
        %p111 = pneg %p110
      $region14: #{tpu_custom_call.1} parent=5 // pred_check_branch
        %113 = sbr.rel (%p111) target = $region16
      $region15: #{tpu_custom_call.1} parent=5 // pred_region
        // Predicated region
        $region17: #{tpu_custom_call.1} parent=15 // pred_check
          %p114 = pneg %p37
        $region18: #{tpu_custom_call.1} parent=15 // pred_check_branch
          %116 = sbr.rel (%p114) target = $region20
        $region19: #{tpu_custom_call.1} parent=15 // pred_region
          %s117 = sand.u32 %s27, 1
          %s118 = scalar_lea.sflag [#allocation3], %s117
          %s119 = sand.u32 %s27, 1
          %s120 = smul.addr %s119, 8
          %s121 = scalar_lea.vmem [#allocation2], %s120
          %123 = vsyncadd %s118, 0
          %s124 = smul.addr %s17, 8
          %s125 = scalar_lea.hbm %s0, %s124
          %s127 = sshll.u32 %s125, 4
          %s128 = int_to_ptr.hbm [resolvable:$true] %s127
          %s129 = sshll.u32 %s121, 4
          %s130 = int_to_ptr.vmem [resolvable:$true] %s129
          %132 = dma.hbm_to_vmem [thread:$0]  %s128, 128, %s130, %s118
        $region20: #{tpu_custom_call.1} parent=15 // pred_fallthru
          _
        // Predicated region
        $region21: #{tpu_custom_call.1} parent=15 // pred_check
          %p133 = pneg %p63
        $region22: #{tpu_custom_call.1} parent=15 // pred_check_branch
          %135 = sbr.rel (%p133) target = $region24
        $region23: #{tpu_custom_call.1} parent=15 // pred_region
          %s136 = sand.u32 %s53, 1
          %s137 = scalar_lea.sflag [#allocation6], %s136
          %s138 = sand.u32 %s53, 1
          %s139 = smul.addr %s138, 8
          %s140 = scalar_lea.vmem [#allocation5], %s139
          %142 = vsyncadd %s137, 0
          %s143 = smul.addr %s17, 8
          %s144 = scalar_lea.hbm %s1, %s143
          %s146 = sshll.u32 %s144, 4
          %s147 = int_to_ptr.hbm [resolvable:$true] %s146
          %s148 = sshll.u32 %s140, 4
          %s149 = int_to_ptr.vmem [resolvable:$true] %s148
          %151 = dma.hbm_to_vmem [thread:$0]  %s147, 128, %s149, %s137
        $region24: #{tpu_custom_call.1} parent=15 // pred_fallthru
          _
      $region16: #{tpu_custom_call.1} parent=5 // pred_fallthru
        _
      %p152 = scmp.le.s32.totalorder 1, %s17
      %p153 = scmp.lt.s32.totalorder %s17, 3
      %p154 = pnand %p152, %p153
      %p155 = pneg %p154
      // Predicated region
      $region25: #{tpu_custom_call.1} parent=5 // pred_check
        _
      $region26: #{tpu_custom_call.1} parent=5 // pred_check_branch
        %157 = sbr.rel (%p154) target = $region28
      $region27: #{tpu_custom_call.1} parent=5 // pred_region
        %s158 = ssub.s32 %s17, 1
        %s159 = sand.u32 %s30, 1
        %s160 = scalar_lea.sflag [#allocation3], %s159
        %s161 = sand.u32 %s30, 1
        %s162 = smul.addr %s161, 8
        %s163 = scalar_lea.vmem [#allocation2], %s162
        // Predicated region
        $region29: #{tpu_custom_call.1} parent=27 // pred_check
          %p164 = pneg %p43
        $region30: #{tpu_custom_call.1} parent=27 // pred_check_branch
          %166 = sbr.rel (%p164) target = $region32
        $region31: #{tpu_custom_call.1} parent=27 // pred_region
          %168 = dma.done %s160, 128
        $region32: #{tpu_custom_call.1} parent=27 // pred_fallthru
          _
        %s169 = sand.u32 %s56, 1
        %s170 = scalar_lea.sflag [#allocation6], %s169
        %s171 = sand.u32 %s56, 1
        %s172 = smul.addr %s171, 8
        %s173 = scalar_lea.vmem [#allocation5], %s172
        // Predicated region
        $region33: #{tpu_custom_call.1} parent=27 // pred_check
          %p174 = pneg %p69
        $region34: #{tpu_custom_call.1} parent=27 // pred_check_branch
          %176 = sbr.rel (%p174) target = $region36
        $region35: #{tpu_custom_call.1} parent=27 // pred_region
          %178 = dma.done %s170, 128
        $region36: #{tpu_custom_call.1} parent=27 // pred_fallthru
          _
        %s179 = sand.u32 %s30, 1
        %s180 = scalar_lea.sflag [#allocation3], %s179
        %s181 = sand.u32 %s30, 1
        %s182 = smul.addr %s181, 8
        %s183 = scalar_lea.vmem [#allocation2], %s182
        %p184 = pneg %p43
        %p185 = pneg %p40
        %s186 = sand.u32 %s56, 1
        %s187 = scalar_lea.sflag [#allocation6], %s186
        %s188 = sand.u32 %s56, 1
        %s189 = smul.addr %s188, 8
        %s190 = scalar_lea.vmem [#allocation5], %s189
        %p191 = pneg %p69
        %p192 = pneg %p66
        %p193 = pneg %p95
        %p194 = pneg %p92
        %s195 = sand.u32 %s82, 1
        %s196 = scalar_lea.sflag [#allocation4], %s195
        %s197 = sand.u32 %s82, 1
        %s198 = smul.addr %s197, 8
        %s199 = scalar_lea.vmem [#allocation7], %s198
        %v200 = vld [vmem:[%s163] sm:$0xff]
        %v201 = vld [vmem:[%s173] sm:$0xff]
        %v202 = vsub.f32 0.0, %v200
        %v203 = vmax.f32 %v202, 0.0
        %v204 = vmul.f32 %v200, %v201
        %v205 = vsub.f32 %v200, %v204
        %v206 = vadd.f32 %v205, %v203
        %v207 = vand.u32 2147483647, %v200
        %v208 = vsub.f32 0.0, %v207
        %v209 = vmul.f32 %v208, 1.442695
        %v210 = vpow.pop %v209
        %v211 = vadd.f32 %v210, 1.0
        %v212 = vlog2.pop %v211
        %v213 = vmul.f32 %v212, 0.6931472
        %v214 = vmul.f32 -0.5, %v210
        %v215 = vadd.f32 %v214, 1.0
        %v216 = vmul.f32 %v215, %v210
        %v217 = vand.u32 2147483647, %v210
        %vm218 = vcmp.lt.f32.partialorder %v217, 0.0004427343
        %v219 = vsel %vm218, %v216, %v213
        %v220 = vadd.f32 %v206, %v219
        %221 = vst [vmem:[%s199] sm:$0xff] %v220
        %s222 = sand.u32 %s82, 1
        %s223 = scalar_lea.sflag [#allocation4], %s222
        %s224 = sand.u32 %s82, 1
        %s225 = smul.addr %s224, 8
        %s226 = scalar_lea.vmem [#allocation7], %s225
        // Predicated region
        $region37: #{tpu_custom_call.1} parent=27 // pred_check
          %p227 = pneg %p92
        $region38: #{tpu_custom_call.1} parent=27 // pred_check_branch
          %229 = sbr.rel (%p227) target = $region40
        $region39: #{tpu_custom_call.1} parent=27 // pred_region
          %231 = vsyncadd %s223, 0
          %s232 = smul.addr %s22, 8
          %s233 = scalar_lea.hbm %s2, %s232
          %s235 = sshll.u32 %s226, 4
          %s236 = int_to_ptr.vmem [resolvable:$true] %s235
          %s237 = sshll.u32 %s233, 4
          %s238 = int_to_ptr.hbm [resolvable:$true] %s237
          %240 = dma.vmem_to_hbm [thread:$0]  %s236, 128, %s238, %s223
        $region40: #{tpu_custom_call.1} parent=27 // pred_fallthru
          _
      $region28: #{tpu_custom_call.1} parent=5 // pred_fallthru
        _
      %p241 = scmp.le.s32.totalorder 2, %s17
      // Predicated region
      $region41: #{tpu_custom_call.1} parent=5 // pred_check
        %p242 = pneg %p241
      $region42: #{tpu_custom_call.1} parent=5 // pred_check_branch
        %244 = sbr.rel (%p242) target = $region44
      $region43: #{tpu_custom_call.1} parent=5 // pred_region
        %s245 = ssub.s32 %s17, 2
        // Predicated region
        $region45: #{tpu_custom_call.1} parent=43 // pred_check
          %p246 = pneg %p98
        $region46: #{tpu_custom_call.1} parent=43 // pred_check_branch
          %248 = sbr.rel (%p246) target = $region48
        $region47: #{tpu_custom_call.1} parent=43 // pred_region
          %s249 = sand.u32 %s83, 1
          %s250 = scalar_lea.sflag [#allocation4], %s249
          %s251 = sand.u32 %s83, 1
          %s252 = smul.addr %s251, 8
          %s253 = scalar_lea.vmem [#allocation7], %s252
          %255 = dma.done %s250, 128
        $region48: #{tpu_custom_call.1} parent=43 // pred_fallthru
          _
      $region44: #{tpu_custom_call.1} parent=5 // pred_fallthru
        _
    $region6: #{tpu_custom_call.1} parent=1 // loop_footer
      %s21 = sadd.s32 1, %s17
    $region7: #{tpu_custom_call.1} parent=1 // loop_footer_branch
      %16 = sbr.rel target = $region3
    $region8: #{tpu_custom_call.1} parent=1 // loop_exit
      _
    %256 = vsyncpa [#allocation3], 1
    %s257 = scalar_lea.sflag [#allocation3], 1
    %258 = vsyncpa %s257, 1
    %259 = vsyncpa [#allocation6], 1
    %s260 = scalar_lea.sflag [#allocation6], 1
    %261 = vsyncpa %s260, 1
    %262 = vsyncpa [#allocation4], 1
    %s263 = scalar_lea.sflag [#allocation4], 1
    %264 = vsyncpa %s263, 1

</llo_original>
